<compile_context>
chip_gen: v7x
topology: tpu7x:2x2x1
jax: 0.10.0
libtpu: 0.0.40
codegen_flags: <defaults>
</compile_context>

<pallas_src>
import jax
import jax.numpy as jnp
from jax.experimental import pallas as pl
from jax.experimental.pallas import tpu as pltpu

LANES = 128
SUBLANES = 8
MAX_TILE_ROWS = 2048  # 2048 * 128 * 4B = 1 MiB per input per step (f32)


def _round_up(x: int, m: int) -> int:
    return ((x + m - 1) // m) * m


def _cdiv(a: int, b: int) -> int:
    return (a + b - 1) // b


def _make_mse_sum_kernel(tile_rows: int, rows: int, tiles_per_shard: int,
                         needs_mask: bool):
    sub_blocks = tile_rows // SUBLANES

    def kernel(p_ref, t_ref, o_ref, acc_ref):
        shard = pl.program_id(0)
        step = pl.program_id(1)

        @pl.when(step == 0)
        def _():
            acc_ref[...] = jnp.zeros_like(acc_ref)

        d = p_ref[...].astype(jnp.float32) - t_ref[...].astype(jnp.float32)
        sq = d * d

        if needs_mask:
            # Zero rows past the true row count: stale data in the padded part of
            # an edge block, or clamped overhang tiles of the second shard.
            tile_idx = shard * tiles_per_shard + step
            row_ids = tile_idx * tile_rows + jax.lax.broadcasted_iota(
                jnp.int32, (tile_rows, LANES), 0)
            sq = jnp.where(row_ids < rows, sq, 0.0)

        # Reduce (tile_rows, 128) -> (8, 128) with pure VPU adds of vreg-aligned
        # sublane groups; no cross-lane XLU work in the hot loop.
        partial = sq[0:SUBLANES, :]
        for r in range(1, sub_blocks):
            partial = partial + sq[r * SUBLANES:(r + 1) * SUBLANES, :]
        acc_ref[...] += partial

        @pl.when(step == pl.num_programs(1) - 1)
        def _():
            o_ref[...] = acc_ref[...]

    return kernel


def sigmoid_mae_loss(pred: jax.Array, target: jax.Array) -> jax.Array:
    """Reproduces SigmoidMAELoss.forward == nn.MSELoss()(pred, target)."""
    assert pred.shape == target.shape, "MSELoss without broadcasting"
    n = pred.size

    p_flat = jnp.ravel(pred)
    t_flat = jnp.ravel(target)

    n_main = (n // LANES) * LANES  # lane-aligned prefix handled by the kernel
    rows = n_main // LANES

    total = jnp.zeros((), jnp.float32)

    if rows > 0:
        # Contiguous prefix; reshape is metadata-only (no pad copies). When
        # n % 128 == 0 the slice is an identity as well (the common case).
        p2 = p_flat[:n_main].reshape(rows, LANES)
        t2 = t_flat[:n_main].reshape(rows, LANES)

        tile_rows = min(MAX_TILE_ROWS, _round_up(rows, SUBLANES))
        # Keep the sublane count a multiple of the packed-dtype tile
        # (8 for f32, 16 for bf16, 32 for int8/fp8).
        itemsize = int(jnp.dtype(pred.dtype).itemsize)
        packed_sublanes = SUBLANES * max(1, 4 // max(itemsize, 1))
        tile_rows = _round_up(tile_rows, packed_sublanes)

        tiles_total = _cdiv(rows, tile_rows)
        # v7x: one shard per TensorCore (no-op on single-core v5e/v6e).
        num_shards = 2 if tiles_total >= 2 else 1
        tiles_per_shard = _cdiv(tiles_total, num_shards)
        covered_rows = num_shards * tiles_per_shard * tile_rows
        needs_mask = covered_rows != rows

        if num_shards * tiles_per_shard != tiles_total:
            # Second shard has overhang steps: clamp them onto the last valid
            # tile (in-bounds re-read; fully masked to zero inside the kernel).
            def in_index_map(c, i):
                return (jnp.minimum(c * tiles_per_shard + i, tiles_total - 1), 0)
        else:
            def in_index_map(c, i):
                return (c * tiles_per_shard + i, 0)

        partials = pl.pallas_call(
            _make_mse_sum_kernel(tile_rows, rows, tiles_per_shard, needs_mask),
            out_shape=jax.ShapeDtypeStruct((num_shards * SUBLANES, LANES),
                                           jnp.float32),
            grid_spec=pltpu.PrefetchScalarGridSpec(
                num_scalar_prefetch=0,
                grid=(num_shards, tiles_per_shard),
                in_specs=[
                    pl.BlockSpec((tile_rows, LANES), in_index_map),
                    pl.BlockSpec((tile_rows, LANES), in_index_map),
                ],
                out_specs=pl.BlockSpec((SUBLANES, LANES), lambda c, i: (c, 0)),
                scratch_shapes=[pltpu.VMEM((SUBLANES, LANES), jnp.float32)],
            ),
            compiler_params=pltpu.CompilerParams(
                dimension_semantics=("parallel", "arbitrary"),
            ),
        )(p2, t2)

        total = total + jnp.sum(partials)

    rem = n - n_main
    if rem:
        # <128-element lane tail: cheaper in plain JAX than padding both inputs.
        d_tail = (p_flat[n_main:].astype(jnp.float32)
                  - t_flat[n_main:].astype(jnp.float32))
        total = total + jnp.sum(d_tail * d_tail)

    return (total / jnp.float32(n)).astype(pred.dtype)


if __name__ == "__main__":
    key = jax.random.PRNGKey(0)
    k1, k2 = jax.random.split(key)
    shape = (2, 4, 16, 16)  # NCHW-style synthetic inputs
    pred = jax.random.normal(k1, shape, dtype=jnp.float32)
    target = jax.random.normal(k2, shape, dtype=jnp.float32)

    loss = jax.block_until_ready(sigmoid_mae_loss(pred, target))

    # Reference check against plain-JAX MSE.
    ref = jnp.mean((pred - target) ** 2)
    assert jnp.allclose(loss, ref, rtol=1e-5, atol=1e-6), (loss, ref)

    print("KERNEL_OK")
</pallas_src>

<mosaic_0001>
module attributes {stable_mosaic.version = 11 : i64} {
  func.func @kernel(%arg0: i32, %arg1: i32, %arg2: memref<16x128xf32, #tpu.memory_space<vmem>>, %arg3: memref<16x128xf32, #tpu.memory_space<vmem>>, %arg4: memref<8x128xf32, #tpu.memory_space<vmem>>, %arg5: memref<8x128xf32, #tpu.memory_space<vmem>>) attributes {dimension_semantics = [#tpu.dimension_semantics<parallel>, #tpu.dimension_semantics<arbitrary>], iteration_bounds = array<i64: 1, 1>, scalar_prefetch = 0 : i64, scratch_operands = 1 : i64, tpu.core_type = #tpu.core_type<tc>, window_params = [{transform_indices = @transform_0, window_bounds = array<i64: 16, 128>}, {transform_indices = @transform_1, window_bounds = array<i64: 16, 128>}, {transform_indices = @transform_2, window_bounds = array<i64: 8, 128>}]} {
    %c0_i32 = arith.constant 0 : i32
    %0 = arith.cmpi eq, %arg1, %c0_i32 : i32
    %1 = arith.extui %0 : i1 to i32
    %c0_i32_0 = arith.constant 0 : i32
    %2 = arith.cmpi ne, %1, %c0_i32_0 : i32
    scf.if %2 {
      %cst = arith.constant 0.000000e+00 : f32
      %16 = vector.broadcast %cst : f32 to vector<8x128xf32>
      %c0_10 = arith.constant 0 : index
      %c0_11 = arith.constant 0 : index
      %17 = vector.load %arg5[%c0_10, %c0_11] : memref<8x128xf32, #tpu.memory_space<vmem>>, vector<8x128xf32>
      tpu.vector_store %arg5[%c0_10, %c0_11], %16 {strides = array<i32>} : memref<8x128xf32, #tpu.memory_space<vmem>>, vector<8x128xf32>,
    } else {
    }
    %c0 = arith.constant 0 : index
    %c0_1 = arith.constant 0 : index
    %3 = vector.load %arg2[%c0, %c0_1] : memref<16x128xf32, #tpu.memory_space<vmem>>, vector<16x128xf32>
    %c0_2 = arith.constant 0 : index
    %c0_3 = arith.constant 0 : index
    %4 = vector.load %arg3[%c0_2, %c0_3] : memref<16x128xf32, #tpu.memory_space<vmem>>, vector<16x128xf32>
    %5 = arith.subf %3, %4 : vector<16x128xf32>
    %6 = arith.mulf %5, %5 : vector<16x128xf32>
    %7 = vector.extract_strided_slice %6 {offsets = [0, 0], sizes = [8, 128], strides = [1, 1]} : vector<16x128xf32> to vector<8x128xf32>
    %8 = vector.extract_strided_slice %6 {offsets = [8, 0], sizes = [8, 128], strides = [1, 1]} : vector<16x128xf32> to vector<8x128xf32>
    %9 = arith.addf %7, %8 : vector<8x128xf32>
    %c0_4 = arith.constant 0 : index
    %c0_5 = arith.constant 0 : index
    %10 = vector.load %arg5[%c0_4, %c0_5] : memref<8x128xf32, #tpu.memory_space<vmem>>, vector<8x128xf32>
    %11 = arith.addf %10, %9 : vector<8x128xf32>
    %c0_6 = arith.constant 0 : index
    %c0_7 = arith.constant 0 : index
    %12 = vector.load %arg5[%c0_6, %c0_7] : memref<8x128xf32, #tpu.memory_space<vmem>>, vector<8x128xf32>
    tpu.vector_store %arg5[%c0_6, %c0_7], %11 {strides = array<i32>} : memref<8x128xf32, #tpu.memory_space<vmem>>, vector<8x128xf32>,
    %c0_i32_8 = arith.constant 0 : i32
    %13 = arith.cmpi eq, %arg1, %c0_i32_8 : i32
    %14 = arith.extui %13 : i1 to i32
    %c0_i32_9 = arith.constant 0 : i32
    %15 = arith.cmpi ne, %14, %c0_i32_9 : i32
    scf.if %15 {
      %c0_10 = arith.constant 0 : index
      %c0_11 = arith.constant 0 : index
      %16 = vector.load %arg5[%c0_10, %c0_11] : memref<8x128xf32, #tpu.memory_space<vmem>>, vector<8x128xf32>
      %c0_12 = arith.constant 0 : index
      %c0_13 = arith.constant 0 : index
      %17 = vector.load %arg4[%c0_12, %c0_13] : memref<8x128xf32, #tpu.memory_space<vmem>>, vector<8x128xf32>
      tpu.vector_store %arg4[%c0_12, %c0_13], %16 {strides = array<i32>} : memref<8x128xf32, #tpu.memory_space<vmem>>, vector<8x128xf32>,
    } else {
    }
    return
  }
  func.func @transform_0(%arg0: i32, %arg1: i32) -> (i32, i32) {
    %c1_i32 = arith.constant 1 : i32
    %0 = arith.muli %arg0, %c1_i32 : i32
    %1 = arith.addi %0, %arg1 : i32
    %c0_i32 = arith.constant 0 : i32
    %c0_i32_0 = arith.constant 0 : i32
    return %1, %c0_i32 : i32, i32
  }
  func.func @transform_1(%arg0: i32, %arg1: i32) -> (i32, i32) {
    %c1_i32 = arith.constant 1 : i32
    %0 = arith.muli %arg0, %c1_i32 : i32
    %1 = arith.addi %0, %arg1 : i32
    %c0_i32 = arith.constant 0 : i32
    %c0_i32_0 = arith.constant 0 : i32
    return %1, %c0_i32 : i32, i32
  }
  func.func @transform_2(%arg0: i32, %arg1: i32) -> (i32, i32) {
    %c0_i32 = arith.constant 0 : i32
    %c0_i32_0 = arith.constant 0 : i32
    return %arg0, %c0_i32 : i32, i32
  }
}

</mosaic_0001>

<llo_original>
// kernel: tpu_custom_call.1
$region0: #{tpu_custom_call.1}
  #allocation0 [shape = 'u32[]', space=smem, size = 0x4, offset = 0x4, fixed_abs, tag = 'smem constant byte address 0x4 - core index']
  #allocation1 [shape = 'u32[144,128]{1,0:T(1,128)}', space=vmem, size = 0x12000, scoped, tag = 'internal scratch']
  #allocation2 [shape = 'f32[8,128]{1,0:T(8,128)}', space=vmem, size = 0x1000, scoped, tag = 'scratch operand']
  %s0 = inlined_call_operand.hbm [shape: f32[16,128], index: 0, kind: input, shape index: {}]
  %s1 = inlined_call_operand.hbm [shape: f32[16,128], index: 1, kind: input, shape index: {}]
  %s2 = inlined_call_operand.hbm [shape: f32[8,128], index: 2, kind: output, shape index: {}]
  %s3 = sld [smem:[#allocation0]]
  $region34: #{tpu_custom_call.1} parent=0
    _
  %s5 = ssub.s32 1, %s3
  %s6 = scalar_select 0, %s5, %s3
  $region1: #{tpu_custom_call.1} parent=0
    #allocation3 [shape = 'u8[8192]{0}', space=vmem, size = 0x2000, scoped, tag = 'input window, operand 0, single buffered']
    #allocation4 [shape = 's32[1]{0}', space=sflag, size = 0x4, scoped, tag = 'scoped memory for tpu_custom_call.1']
    #allocation5 [shape = 's32[1]{0}', space=sflag, size = 0x4, scoped, tag = 'scoped memory for tpu_custom_call.1']
    #allocation6 [shape = 'u8[8192]{0}', space=vmem, size = 0x2000, scoped, tag = 'input window, operand 1, single buffered']
    #allocation7 [shape = 's32[1]{0}', space=sflag, size = 0x4, scoped, tag = 'scoped memory for tpu_custom_call.1']
    #allocation8 [shape = 'u8[4096]{0}', space=vmem, size = 0x1000, scoped, tag = 'output window, operand 0, single buffered']
    %7 = vsyncpa [#allocation4], 0
    %8 = vsyncpa [#allocation7], 0
    %9 = vsyncpa [#allocation5], 0
    // Predicated region
    $region2: #{tpu_custom_call.1} parent=1 // pred_check
      _
    $region3: #{tpu_custom_call.1} parent=1 // pred_check_branch
      %11 = sbr.rel (0) target = $region5
    $region4: #{tpu_custom_call.1} parent=1 // pred_region
      %s12 = sadd.s32 0, 0
      %s13 = smul.u32 2, %s12
      %s15 = ssub.s32 256, 256
      %16 = vsyncadd [#allocation4], %s15
      %s17 = smul.addr %s13, 128
      %s18 = scalar_lea.hbm %s0, %s17
      %s19 = sshll.u32 [#allocation3], 4
      %s20 = int_to_ptr.vmem [resolvable:$true] %s19
      %25 = dma.hbm_to_vmem [thread:$0]  %s18, 256, %s20, [#allocation4], 128, 128, 8
    $region5: #{tpu_custom_call.1} parent=1 // pred_fallthru
      _
    // Predicated region
    $region6: #{tpu_custom_call.1} parent=1 // pred_check
      _
    $region7: #{tpu_custom_call.1} parent=1 // pred_check_branch
      %27 = sbr.rel (0) target = $region9
    $region8: #{tpu_custom_call.1} parent=1 // pred_region
      %s28 = sadd.s32 0, 0
      %s29 = smul.u32 2, %s28
      %s31 = ssub.s32 256, 256
      %32 = vsyncadd [#allocation7], %s31
      %s33 = smul.addr %s29, 128
      %s34 = scalar_lea.hbm %s1, %s33
      %s35 = sshll.u32 [#allocation6], 4
      %s36 = int_to_ptr.vmem [resolvable:$true] %s35
      %41 = dma.hbm_to_vmem [thread:$0]  %s34, 256, %s36, [#allocation7], 128, 128, 8
    $region9: #{tpu_custom_call.1} parent=1 // pred_fallthru
      _
    // Predicated region
    $region10: #{tpu_custom_call.1} parent=1 // pred_check
      _
    $region11: #{tpu_custom_call.1} parent=1 // pred_check_branch
      %43 = sbr.rel (0) target = $region13
    $region12: #{tpu_custom_call.1} parent=1 // pred_region
      %44 = dma.done [#allocation4], 256
    $region13: #{tpu_custom_call.1} parent=1 // pred_fallthru
      _
    // Predicated region
    $region14: #{tpu_custom_call.1} parent=1 // pred_check
      _
    $region15: #{tpu_custom_call.1} parent=1 // pred_check_branch
      %46 = sbr.rel (0) target = $region17
    $region16: #{tpu_custom_call.1} parent=1 // pred_region
      %47 = dma.done [#allocation7], 256
    $region17: #{tpu_custom_call.1} parent=1 // pred_fallthru
      _
    %s48 = sadd.s32 0, 0
    %s49 = smul.u32 2, %s48
    %s50 = sadd.s32 0, 0
    %s51 = smul.u32 2, %s50
    %p52 = scmp.eq.s32.totalorder 0, 0
    // Predicated region
    $region18: #{tpu_custom_call.1} parent=1 // pred_check
      %p53 = pneg %p52
    $region19: #{tpu_custom_call.1} parent=1 // pred_check_branch
      %55 = sbr.rel (%p53) target = $region21
    $region20: #{tpu_custom_call.1} parent=1 // pred_region
      %56 = vst [vmem:[#allocation2] sm:$0xff] 0.0
    $region21: #{tpu_custom_call.1} parent=1 // pred_fallthru
      _
    %v57 = vld [vmem:[#allocation3] sm:$0xff]
    %v58 = vld [vmem:[#allocation3 + $0x8] sm:$0xff]
    %v59 = vld [vmem:[#allocation6] sm:$0xff]
    %v60 = vld [vmem:[#allocation6 + $0x8] sm:$0xff]
    %v61 = vsub.f32 %v57, %v59
    %v62 = vsub.f32 %v58, %v60
    %v63 = vmul.f32 %v61, %v61
    %v64 = vmul.f32 %v62, %v62
    %v65 = vadd.f32 %v63, %v64
    %v66 = vld [vmem:[#allocation2] sm:$0xff]
    %v67 = vadd.f32 %v66, %v65
    %68 = vst [vmem:[#allocation2] sm:$0xff] %v67
    // Predicated region
    $region22: #{tpu_custom_call.1} parent=1 // pred_check
      %p69 = pneg %p52
    $region23: #{tpu_custom_call.1} parent=1 // pred_check_branch
      %71 = sbr.rel (%p69) target = $region25
    $region24: #{tpu_custom_call.1} parent=1 // pred_region
      %v72 = vld [vmem:[#allocation2] sm:$0xff]
      %73 = vst [vmem:[#allocation8] sm:$0xff] %v72
    $region25: #{tpu_custom_call.1} parent=1 // pred_fallthru
      _
    // Predicated region
    $region26: #{tpu_custom_call.1} parent=1 // pred_check
      _
    $region27: #{tpu_custom_call.1} parent=1 // pred_check_branch
      %75 = sbr.rel (0) target = $region29
    $region28: #{tpu_custom_call.1} parent=1 // pred_region
      %s77 = ssub.s32 128, 128
      %78 = vsyncadd [#allocation5], %s77
      %s80 = sshll.u32 [#allocation8], 4
      %s81 = int_to_ptr.vmem [resolvable:$true] %s80
      %83 = dma.vmem_to_hbm [thread:$0]  %s81, 128, %s2, [#allocation5]
    $region29: #{tpu_custom_call.1} parent=1 // pred_fallthru
      _
    // Predicated region
    $region30: #{tpu_custom_call.1} parent=1 // pred_check
      _
    $region31: #{tpu_custom_call.1} parent=1 // pred_check_branch
      %85 = sbr.rel (0) target = $region33
    $region32: #{tpu_custom_call.1} parent=1 // pred_region
      %86 = dma.done [#allocation5], 128
    $region33: #{tpu_custom_call.1} parent=1 // pred_fallthru
      _
    %87 = vsyncpa [#allocation4], 1
    %88 = vsyncpa [#allocation7], 1
    %89 = vsyncpa [#allocation5], 1

</llo_original>
